<compile_context>
chip_gen: v7x
topology: tpu7x:2x2x1
jax: 0.10.0
libtpu: 0.0.40
codegen_flags: <defaults>
</compile_context>

<pallas_src>
import inspect

import jax
import jax.numpy as jnp
from jax.experimental import pallas as pl
from jax.experimental.pallas import tpu as pltpu


def _round_up(x, m):
    return ((x + m - 1) // m) * m


def _single_buffer_kwargs():
    """kwargs to single-buffer a grid-invariant operand, if this jax supports it."""
    if hasattr(pl, "Buffered"):
        try:
            if "pipeline_mode" in inspect.signature(pl.BlockSpec).parameters:
                return {"pipeline_mode": pl.Buffered(1)}
        except (TypeError, ValueError):
            pass
    return {}


def _vmem_physical_bytes():
    """Physical VMEM per TensorCore; device_kind fallback, default 128 MiB."""
    try:
        return int(pltpu.get_tpu_info().vmem_capacity_bytes)
    except Exception:
        pass
    try:
        kind = jax.devices()[0].device_kind.lower()
        if "7" in kind:                  # v7x: 64 MiB per TensorCore
            return 64 * 1024 * 1024
    except Exception:
        pass
    return 128 * 1024 * 1024             # v5e / v6e


def _tm_candidates(M, d_model):
    """Row-tile candidates, largest first; 256-aligned when M is large."""
    if M <= 256:
        cands = [M]                       # full-dim block is always layout-legal
        for t in (128, 64, 32, 16, 8):
            if t < M:
                cands.append(t)
        return cands
    cap = 1024 if d_model <= 1024 else 512
    half = _round_up((M + 1) // 2, 256)   # keep >= 2 row tiles for v7x's 2 TCs
    base = min(cap, half)
    cands = [base]
    for t in (768, 512, 256, 128, 64, 32, 16, 8):
        if t < base:
            cands.append(t)
    return cands


def _dff_tile_candidates(d_ff):
    """d_ff chunk candidates: divisors of d_ff, 256-aligned first, then 128."""
    tiles = []
    for align in (256, 128):
        t = (d_ff // align) * align
        while t >= align:
            if d_ff % t == 0 and t not in tiles:
                tiles.append(t)
            t -= align
    return tiles


def _select_config(M, d_model, d_ff, x_itemsize, out_itemsize):
    phys = _vmem_physical_bytes()
    budget = int(phys * 0.75)            # 96 MiB on 128 MiB chips, 48 MiB on v7x
    weight_bufs = 1 if _single_buffer_kwargs() else 2
    small = 16 * (d_ff + 4 * d_model)    # biases / LN params (generous)

    def act_bytes(tm, chunked):
        b = 2 * tm * d_model * x_itemsize + 2 * tm * d_model * out_itemsize
        if chunked:
            b += tm * d_model * 4        # f32 accumulator scratch
            b += tm * d_model * 2        # bf16 x scratch
        return b

    w_resident = weight_bufs * 2 * (d_model * d_ff * 2)      # W1 + W2, bf16

    # Fast path: weights fully VMEM-resident (no weight re-streaming).
    for tm in _tm_candidates(M, d_model):
        if w_resident + act_bytes(tm, False) + small <= budget:
            return {"mode": "resident", "tm": tm, "tf": d_ff, "vmem_limit": budget}

    # Chunked path: stream double-buffered d_ff weight slabs.
    for tm in _tm_candidates(M, d_model):
        for tf in _dff_tile_candidates(d_ff):
            w_chunk = 2 * 2 * (d_model * tf * 2)             # W1+W2 chunk, bf16, 2 bufs
            if w_chunk + act_bytes(tm, True) + small <= budget:
                return {"mode": "chunked", "tm": tm, "tf": tf, "vmem_limit": budget}

    # Last resort (e.g. d_ff not a multiple of 128): keep weights resident with
    # the smallest row tile and push the VMEM limit toward physical.
    tm = _tm_candidates(M, d_model)[-1]
    need = w_resident + act_bytes(tm, False) + small + (4 << 20)
    limit = max(budget, min(int(phys * 0.95), need))
    return {"mode": "resident", "tm": tm, "tf": d_ff, "vmem_limit": limit}


def _ffn_kernel_resident(x_ref, w1_ref, b1_ref, w2_ref, b2_ref, gamma_ref,
                         beta_ref, o_ref):
    x_f32 = x_ref[...].astype(jnp.float32)
    # conv1(k=1): x @ W1 + b1, ReLU.  bf16 MXU operands, f32 accumulation.
    h = jnp.dot(x_ref[...].astype(jnp.bfloat16), w1_ref[...],
                preferred_element_type=jnp.float32)
    h = jnp.maximum(h + b1_ref[...], 0.0)
    # conv2(k=1) + bias + residual
    y = jnp.dot(h.astype(jnp.bfloat16), w2_ref[...],
                preferred_element_type=jnp.float32)
    y = y + b2_ref[...] + x_f32
    # LayerNorm over d_model (eps=1e-5, biased variance, like torch)
    mean = jnp.mean(y, axis=-1, keepdims=True)
    var = jnp.mean((y - mean) * (y - mean), axis=-1, keepdims=True)
    y_norm = (y - mean) * jax.lax.rsqrt(var + 1e-5)
    o_ref[...] = (y_norm * gamma_ref[...] + beta_ref[...]).astype(o_ref.dtype)


def _ffn_kernel_chunked(x_ref, w1t_ref, b1_ref, w2_ref, b2_ref, gamma_ref,
                        beta_ref, o_ref, acc_ref, xb_ref):
    j = pl.program_id(1)

    @pl.when(j == 0)
    def _init():
        acc_ref[...] = jnp.zeros_like(acc_ref)
        # x -> bf16 cast hoisted: done once per row tile, reused for every chunk
        xb_ref[...] = x_ref[...].astype(jnp.bfloat16)

    # First matmul contracts over d_model against the transposed W1 row slab.
    h = jax.lax.dot_general(xb_ref[...], w1t_ref[...],
                            dimension_numbers=(((1,), (1,)), ((), ())),
                            preferred_element_type=jnp.float32)
    h = jnp.maximum(h + b1_ref[...], 0.0)
    # Partial sum of conv2 over this d_ff chunk (ReLU is elementwise over d_ff
    # columns, so chunking the contraction is exact).
    acc_ref[...] += jnp.dot(h.astype(jnp.bfloat16), w2_ref[...],
                            preferred_element_type=jnp.float32)

    @pl.when(j == pl.num_programs(1) - 1)
    def _finalize():
        y = acc_ref[...] + b2_ref[...] + x_ref[...].astype(jnp.float32)
        mean = jnp.mean(y, axis=-1, keepdims=True)
        var = jnp.mean((y - mean) * (y - mean), axis=-1, keepdims=True)
        y_norm = (y - mean) * jax.lax.rsqrt(var + 1e-5)
        o_ref[...] = (y_norm * gamma_ref[...] + beta_ref[...]).astype(o_ref.dtype)


def poswise_ffn(x, w1, b1, w2, b2, gamma, beta):
    """x: [batch, seq, d_model] -> [batch, seq, d_model].

    w1: (d_model, d_ff)   (Conv1d(d_model->d_ff, k=1) weight, transposed)
    w2: (d_ff, d_model)   (Conv1d(d_ff->d_model, k=1) weight, transposed)
    """
    batch, seq, d_model = x.shape
    d_ff = w1.shape[1]
    M = batch * seq
    x2d = x.reshape(M, d_model)

    itemsize = jnp.dtype(x.dtype).itemsize
    cfg = _select_config(M, d_model, d_ff, itemsize, itemsize)
    tm, tf = cfg["tm"], cfg["tf"]
    num_m = pl.cdiv(M, tm)
    inv = _single_buffer_kwargs()   # single-buffer grid-invariant operands

    b1r = b1.reshape(1, d_ff).astype(jnp.float32)
    b2r = b2.reshape(1, d_model).astype(jnp.float32)
    gr = gamma.reshape(1, d_model).astype(jnp.float32)
    br = beta.reshape(1, d_model).astype(jnp.float32)

    if cfg["mode"] == "resident":
        w1b = w1.astype(jnp.bfloat16)            # (d_model, d_ff)
        w2b = w2.astype(jnp.bfloat16)            # (d_ff, d_model)
        out2d = pl.pallas_call(
            _ffn_kernel_resident,
            out_shape=jax.ShapeDtypeStruct((M, d_model), x.dtype),
            grid_spec=pltpu.PrefetchScalarGridSpec(
                num_scalar_prefetch=0,
                grid=(num_m,),
                in_specs=[
                    pl.BlockSpec((tm, d_model), lambda i: (i, 0)),          # x tile
                    pl.BlockSpec((d_model, d_ff), lambda i: (0, 0), **inv),  # W1
                    pl.BlockSpec((1, d_ff), lambda i: (0, 0), **inv),        # b1
                    pl.BlockSpec((d_ff, d_model), lambda i: (0, 0), **inv),  # W2
                    pl.BlockSpec((1, d_model), lambda i: (0, 0), **inv),     # b2
                    pl.BlockSpec((1, d_model), lambda i: (0, 0), **inv),     # gamma
                    pl.BlockSpec((1, d_model), lambda i: (0, 0), **inv),     # beta
                ],
                out_specs=pl.BlockSpec((tm, d_model), lambda i: (i, 0)),
            ),
            compiler_params=pltpu.CompilerParams(
                dimension_semantics=("parallel",),
                vmem_limit_bytes=cfg["vmem_limit"],
            ),
        )(x2d, w1b, b1r, w2b, b2r, gr, br)
    else:
        num_f = d_ff // tf
        # W1 stored transposed so each d_ff chunk is a contiguous row slab.
        w1tb = jnp.transpose(w1).astype(jnp.bfloat16)   # (d_ff, d_model)
        w2b = w2.astype(jnp.bfloat16)                   # (d_ff, d_model)
        out2d = pl.pallas_call(
            _ffn_kernel_chunked,
            out_shape=jax.ShapeDtypeStruct((M, d_model), x.dtype),
            grid_spec=pltpu.PrefetchScalarGridSpec(
                num_scalar_prefetch=0,
                grid=(num_m, num_f),
                in_specs=[
                    pl.BlockSpec((tm, d_model), lambda i, j: (i, 0)),        # x tile
                    pl.BlockSpec((tf, d_model), lambda i, j: (j, 0)),        # W1^T slab
                    pl.BlockSpec((1, tf), lambda i, j: (0, j)),              # b1 chunk
                    pl.BlockSpec((tf, d_model), lambda i, j: (j, 0)),        # W2 slab
                    pl.BlockSpec((1, d_model), lambda i, j: (0, 0), **inv),  # b2
                    pl.BlockSpec((1, d_model), lambda i, j: (0, 0), **inv),  # gamma
                    pl.BlockSpec((1, d_model), lambda i, j: (0, 0), **inv),  # beta
                ],
                out_specs=pl.BlockSpec((tm, d_model), lambda i, j: (i, 0)),
                scratch_shapes=[
                    pltpu.VMEM((tm, d_model), jnp.float32),   # f32 accumulator
                    pltpu.VMEM((tm, d_model), jnp.bfloat16),  # hoisted bf16 x
                ],
            ),
            compiler_params=pltpu.CompilerParams(
                dimension_semantics=("parallel", "arbitrary"),
                vmem_limit_bytes=cfg["vmem_limit"],
            ),
        )(x2d, w1tb, b1r, w2b, b2r, gr, br)

    return out2d.reshape(batch, seq, d_model)


def reference(x, w1, b1, w2, b2, gamma, beta):
    h = jnp.maximum(jnp.einsum("bsd,df->bsf", x, w1) + b1, 0.0)
    y = jnp.einsum("bsf,fd->bsd", h, w2) + b2 + x
    mean = jnp.mean(y, axis=-1, keepdims=True)
    var = jnp.mean((y - mean) ** 2, axis=-1, keepdims=True)
    return (y - mean) * jax.lax.rsqrt(var + 1e-5) * gamma + beta


if __name__ == "__main__":
    batch, seq, d_model, d_ff = 2, 8, 32, 64

    key = jax.random.PRNGKey(0)
    kx, k1, k2, k3, k4 = jax.random.split(key, 5)

    x = jax.random.normal(kx, (batch, seq, d_model), dtype=jnp.float32)
    # Conv1d(d_model, d_ff, 1) weight is (d_ff, d_model, 1); stored transposed
    # as (d_model, d_ff) so the kernel can do x @ W1 directly.
    w1 = jax.random.normal(k1, (d_model, d_ff), dtype=jnp.float32) * 0.1
    b1 = jax.random.normal(k2, (d_ff,), dtype=jnp.float32) * 0.1
    w2 = jax.random.normal(k3, (d_ff, d_model), dtype=jnp.float32) * 0.1
    b2 = jax.random.normal(k4, (d_model,), dtype=jnp.float32) * 0.1
    gamma = jnp.ones((d_model,), dtype=jnp.float32)
    beta = jnp.zeros((d_model,), dtype=jnp.float32)

    out = poswise_ffn(x, w1, b1, w2, b2, gamma, beta)
    out = jax.block_until_ready(out)

    ref = reference(x, w1, b1, w2, b2, gamma, beta)
    assert out.shape == (batch, seq, d_model)
    # bf16 MXU operands -> looser tolerance than an all-f32 matmul.
    max_err = float(jnp.max(jnp.abs(out - ref)))
    assert jnp.allclose(out, ref, atol=5e-2, rtol=5e-2), max_err
    print("KERNEL_OK")
</pallas_src>

<mosaic_0001>
module attributes {stable_mosaic.version = 11 : i64} {
  func.func @_ffn_kernel_resident(%arg0: i32, %arg1: memref<16x32xf32, #tpu.memory_space<vmem>>, %arg2: memref<32x64xbf16, #tpu.memory_space<vmem>>, %arg3: memref<1x64xf32, #tpu.memory_space<vmem>>, %arg4: memref<64x32xbf16, #tpu.memory_space<vmem>>, %arg5: memref<1x32xf32, #tpu.memory_space<vmem>>, %arg6: memref<1x32xf32, #tpu.memory_space<vmem>>, %arg7: memref<1x32xf32, #tpu.memory_space<vmem>>, %arg8: memref<16x32xf32, #tpu.memory_space<vmem>>) attributes {dimension_semantics = [#tpu.dimension_semantics<parallel>], iteration_bounds = array<i64: 1>, scalar_prefetch = 0 : i64, scratch_operands = 0 : i64, tpu.core_type = #tpu.core_type<tc>, window_params = [{transform_indices = @transform_0, window_bounds = array<i64: 16, 32>}, {pipeline_mode = #tpu.pipeline_mode<synchronous>, transform_indices = @transform_1, window_bounds = array<i64: 32, 64>}, {pipeline_mode = #tpu.pipeline_mode<synchronous>, transform_indices = @transform_2, window_bounds = array<i64: 1, 64>}, {pipeline_mode = #tpu.pipeline_mode<synchronous>, transform_indices = @transform_3, window_bounds = array<i64: 64, 32>}, {pipeline_mode = #tpu.pipeline_mode<synchronous>, transform_indices = @transform_4, window_bounds = array<i64: 1, 32>}, {pipeline_mode = #tpu.pipeline_mode<synchronous>, transform_indices = @transform_5, window_bounds = array<i64: 1, 32>}, {pipeline_mode = #tpu.pipeline_mode<synchronous>, transform_indices = @transform_6, window_bounds = array<i64: 1, 32>}, {transform_indices = @transform_7, window_bounds = array<i64: 16, 32>}]} {
    %c0 = arith.constant 0 : index
    %c0_0 = arith.constant 0 : index
    %0 = vector.load %arg1[%c0, %c0_0] : memref<16x32xf32, #tpu.memory_space<vmem>>, vector<16x32xf32>
    %c0_1 = arith.constant 0 : index
    %c0_2 = arith.constant 0 : index
    %1 = vector.load %arg1[%c0_1, %c0_2] : memref<16x32xf32, #tpu.memory_space<vmem>>, vector<16x32xf32>
    %2 = arith.truncf %1 : vector<16x32xf32> to vector<16x32xbf16>
    %c0_3 = arith.constant 0 : index
    %c0_4 = arith.constant 0 : index
    %3 = vector.load %arg2[%c0_3, %c0_4] : memref<32x64xbf16, #tpu.memory_space<vmem>>, vector<32x64xbf16>
    %cst = arith.constant dense<0.000000e+00> : vector<16x64xf32>
    %4 = tpu.matmul %2, %3, %cst {dimension_numbers = #tpu.dot_dimension_numbers<[1], [0], [0], [1], [0, 0, 1, 1], [], []>} : vector<16x32xbf16>, vector<32x64xbf16>, vector<16x64xf32> -> vector<16x64xf32>
    %c0_5 = arith.constant 0 : index
    %c0_6 = arith.constant 0 : index
    %5 = vector.load %arg3[%c0_5, %c0_6] : memref<1x64xf32, #tpu.memory_space<vmem>>, vector<1x64xf32>
    %6 = vector.broadcast %5 : vector<1x64xf32> to vector<16x64xf32>
    %7 = arith.addf %4, %6 : vector<16x64xf32>
    %cst_7 = arith.constant 0.000000e+00 : f32
    %8 = vector.broadcast %cst_7 : f32 to vector<16x64xf32>
    %9 = arith.maximumf %7, %8 : vector<16x64xf32>
    %10 = arith.truncf %9 : vector<16x64xf32> to vector<16x64xbf16>
    %c0_8 = arith.constant 0 : index
    %c0_9 = arith.constant 0 : index
    %11 = vector.load %arg4[%c0_8, %c0_9] : memref<64x32xbf16, #tpu.memory_space<vmem>>, vector<64x32xbf16>
    %cst_10 = arith.constant dense<0.000000e+00> : vector<16x32xf32>
    %12 = tpu.matmul %10, %11, %cst_10 {dimension_numbers = #tpu.dot_dimension_numbers<[1], [0], [0], [1], [0, 0, 1, 1], [], []>} : vector<16x64xbf16>, vector<64x32xbf16>, vector<16x32xf32> -> vector<16x32xf32>
    %c0_11 = arith.constant 0 : index
    %c0_12 = arith.constant 0 : index
    %13 = vector.load %arg5[%c0_11, %c0_12] : memref<1x32xf32, #tpu.memory_space<vmem>>, vector<1x32xf32>
    %14 = vector.broadcast %13 : vector<1x32xf32> to vector<16x32xf32>
    %15 = arith.addf %12, %14 : vector<16x32xf32>
    %16 = arith.addf %15, %0 : vector<16x32xf32>
    %cst_13 = arith.constant dense<0.000000e+00> : vector<16xf32>
    %17 = vector.multi_reduction <add>, %16, %cst_13 [1] : vector<16x32xf32> to vector<16xf32>
    %18 = vector.shape_cast %17 : vector<16xf32> to vector<16x1xf32>
    %cst_14 = arith.constant 3.200000e+01 : f32
    %19 = vector.broadcast %cst_14 : f32 to vector<16x1xf32>
    %20 = arith.divf %18, %19 : vector<16x1xf32>
    %21 = vector.broadcast %20 : vector<16x1xf32> to vector<16x32xf32>
    %22 = arith.subf %16, %21 : vector<16x32xf32>
    %23 = vector.broadcast %20 : vector<16x1xf32> to vector<16x32xf32>
    %24 = arith.subf %16, %23 : vector<16x32xf32>
    %25 = arith.mulf %22, %24 : vector<16x32xf32>
    %cst_15 = arith.constant dense<0.000000e+00> : vector<16xf32>
    %26 = vector.multi_reduction <add>, %25, %cst_15 [1] : vector<16x32xf32> to vector<16xf32>
    %27 = vector.shape_cast %26 : vector<16xf32> to vector<16x1xf32>
    %cst_16 = arith.constant 3.200000e+01 : f32
    %28 = vector.broadcast %cst_16 : f32 to vector<16x1xf32>
    %29 = arith.divf %27, %28 : vector<16x1xf32>
    %30 = vector.broadcast %20 : vector<16x1xf32> to vector<16x32xf32>
    %31 = arith.subf %16, %30 : vector<16x32xf32>
    %cst_17 = arith.constant 9.99999974E-6 : f32
    %32 = vector.broadcast %cst_17 : f32 to vector<16x1xf32>
    %33 = arith.addf %29, %32 : vector<16x1xf32>
    %34 = math.rsqrt %33 : vector<16x1xf32>
    %35 = vector.broadcast %34 : vector<16x1xf32> to vector<16x32xf32>
    %36 = arith.mulf %31, %35 : vector<16x32xf32>
    %c0_18 = arith.constant 0 : index
    %c0_19 = arith.constant 0 : index
    %37 = vector.load %arg6[%c0_18, %c0_19] : memref<1x32xf32, #tpu.memory_space<vmem>>, vector<1x32xf32>
    %38 = vector.broadcast %37 : vector<1x32xf32> to vector<16x32xf32>
    %39 = arith.mulf %36, %38 : vector<16x32xf32>
    %c0_20 = arith.constant 0 : index
    %c0_21 = arith.constant 0 : index
    %40 = vector.load %arg7[%c0_20, %c0_21] : memref<1x32xf32, #tpu.memory_space<vmem>>, vector<1x32xf32>
    %41 = vector.broadcast %40 : vector<1x32xf32> to vector<16x32xf32>
    %42 = arith.addf %39, %41 : vector<16x32xf32>
    %c0_22 = arith.constant 0 : index
    %c0_23 = arith.constant 0 : index
    %43 = vector.load %arg8[%c0_22, %c0_23] : memref<16x32xf32, #tpu.memory_space<vmem>>, vector<16x32xf32>
    tpu.vector_store %arg8[%c0_22, %c0_23], %42 {strides = array<i32>} : memref<16x32xf32, #tpu.memory_space<vmem>>, vector<16x32xf32>,
    return
  }
  func.func @transform_0(%arg0: i32) -> (i32, i32) {
    %c0_i32 = arith.constant 0 : i32
    %c0_i32_0 = arith.constant 0 : i32
    return %arg0, %c0_i32 : i32, i32
  }
  func.func @transform_1(%arg0: i32) -> (i32, i32) {
    %c0_i32 = arith.constant 0 : i32
    %c0_i32_0 = arith.constant 0 : i32
    %c0_i32_1 = arith.constant 0 : i32
    return %c0_i32, %c0_i32_0 : i32, i32
  }
  func.func @transform_2(%arg0: i32) -> (i32, i32) {
    %c0_i32 = arith.constant 0 : i32
    %c0_i32_0 = arith.constant 0 : i32
    %c0_i32_1 = arith.constant 0 : i32
    return %c0_i32, %c0_i32_0 : i32, i32
  }
  func.func @transform_3(%arg0: i32) -> (i32, i32) {
    %c0_i32 = arith.constant 0 : i32
    %c0_i32_0 = arith.constant 0 : i32
    %c0_i32_1 = arith.constant 0 : i32
    return %c0_i32, %c0_i32_0 : i32, i32
  }
  func.func @transform_4(%arg0: i32) -> (i32, i32) {
    %c0_i32 = arith.constant 0 : i32
    %c0_i32_0 = arith.constant 0 : i32
    %c0_i32_1 = arith.constant 0 : i32
    return %c0_i32, %c0_i32_0 : i32, i32
  }
  func.func @transform_5(%arg0: i32) -> (i32, i32) {
    %c0_i32 = arith.constant 0 : i32
    %c0_i32_0 = arith.constant 0 : i32
    %c0_i32_1 = arith.constant 0 : i32
    return %c0_i32, %c0_i32_0 : i32, i32
  }
  func.func @transform_6(%arg0: i32) -> (i32, i32) {
    %c0_i32 = arith.constant 0 : i32
    %c0_i32_0 = arith.constant 0 : i32
    %c0_i32_1 = arith.constant 0 : i32
    return %c0_i32, %c0_i32_0 : i32, i32
  }
  func.func @transform_7(%arg0: i32) -> (i32, i32) {
    %c0_i32 = arith.constant 0 : i32
    %c0_i32_0 = arith.constant 0 : i32
    return %arg0, %c0_i32 : i32, i32
  }
}

</mosaic_0001>

<llo_original>
// kernel: tpu_custom_call.1
$region0: #{tpu_custom_call.1}
  #allocation0 [shape = 'u32[]', space=smem, size = 0x4, offset = 0x4, fixed_abs, tag = 'smem constant byte address 0x4 - core index']
  #allocation1 [shape = 'u32[144,128]{1,0:T(1,128)}', space=vmem, size = 0x12000, scoped, tag = 'internal scratch']
  %s0 = inlined_call_operand.hbm [shape: f32[16,32], index: 0, kind: input, shape index: {}]
  %s1 = inlined_call_operand.hbm [shape: bf16[32,64], index: 1, kind: input, shape index: {}]
  %s2 = inlined_call_operand.hbm [shape: f32[1,64], index: 2, kind: input, shape index: {}]
  %s3 = inlined_call_operand.hbm [shape: bf16[64,32], index: 3, kind: input, shape index: {}]
  %s4 = inlined_call_operand.hbm [shape: f32[1,32], index: 4, kind: input, shape index: {}]
  %s5 = inlined_call_operand.hbm [shape: f32[1,32], index: 5, kind: input, shape index: {}]
  %s6 = inlined_call_operand.hbm [shape: f32[1,32], index: 6, kind: input, shape index: {}]
  %s7 = inlined_call_operand.hbm [shape: f32[16,32], index: 7, kind: output, shape index: {}]
  %s8 = sld [smem:[#allocation0]]
  $region66: #{tpu_custom_call.1} parent=0
    _
  %s10 = ssub.s32 1, %s8
  %s11 = scalar_select 0, %s10, %s8
  $region1: #{tpu_custom_call.1} parent=0
    #allocation2 [shape = 'u8[8192]{0}', space=vmem, size = 0x2000, scoped, tag = 'input window, operand 0, single buffered']
    #allocation3 [shape = 's32[1]{0}', space=sflag, size = 0x4, scoped, tag = 'scoped memory for tpu_custom_call.1']
    #allocation4 [shape = 's32[1]{0}', space=sflag, size = 0x4, scoped, tag = 'scoped memory for tpu_custom_call.1']
    #allocation5 [shape = 'u8[8192]{0}', space=vmem, size = 0x2000, scoped, tag = 'input window, operand 1, single buffered']
    #allocation6 [shape = 's32[1]{0}', space=sflag, size = 0x4, scoped, tag = 'scoped memory for tpu_custom_call.1']
    #allocation7 [shape = 'u8[512]{0}', space=vmem, size = 0x400, scoped, tag = 'input window, operand 2, single buffered']
    #allocation8 [shape = 'u8[16384]{0}', space=vmem, size = 0x4000, scoped, tag = 'input window, operand 3, single buffered']
    #allocation9 [shape = 's32[1]{0}', space=sflag, size = 0x4, scoped, tag = 'scoped memory for tpu_custom_call.1']
    #allocation10 [shape = 'u8[512]{0}', space=vmem, size = 0x400, scoped, tag = 'input window, operand 4, single buffered']
    #allocation11 [shape = 'u8[512]{0}', space=vmem, size = 0x400, scoped, tag = 'input window, operand 5, single buffered']
    #allocation12 [shape = 's32[1]{0}', space=sflag, size = 0x4, scoped, tag = 'scoped memory for tpu_custom_call.1']
    #allocation13 [shape = 'u8[512]{0}', space=vmem, size = 0x400, scoped, tag = 'input window, operand 6, single buffered']
    #allocation14 [shape = 'u8[8192]{0}', space=vmem, size = 0x2000, scoped, tag = 'output window, operand 0, single buffered']
    %12 = vsyncpa [#allocation3], 0
    %13 = vsyncpa [#allocation6], 0
    %14 = vsyncpa [#allocation9], 0
    %15 = vsyncpa [#allocation12], 0
    %16 = vsyncpa [#allocation4], 0
    // Predicated region
    $region2: #{tpu_custom_call.1} parent=1 // pred_check
      _
    $region3: #{tpu_custom_call.1} parent=1 // pred_check_branch
      %18 = sbr.rel (0) target = $region5
    $region4: #{tpu_custom_call.1} parent=1 // pred_region
      %s20 = ssub.s32 256, 256
      %21 = vsyncadd [#allocation3], %s20
      %s22 = sshll.u32 [#allocation2], 4
      %s23 = int_to_ptr.vmem [resolvable:$true] %s22
      %28 = dma.hbm_to_vmem [thread:$0]  %s0, 256, %s23, [#allocation3], 128, 128, 8
    $region5: #{tpu_custom_call.1} parent=1 // pred_fallthru
      _
    // Predicated region
    $region6: #{tpu_custom_call.1} parent=1 // pred_check
      _
    $region7: #{tpu_custom_call.1} parent=1 // pred_check_branch
      %30 = sbr.rel (0) target = $region9
    $region8: #{tpu_custom_call.1} parent=1 // pred_region
      %s32 = ssub.s32 256, 256
      %33 = vsyncadd [#allocation6], %s32
      %s34 = sshll.u32 [#allocation5], 4
      %s35 = int_to_ptr.vmem [resolvable:$true] %s34
      %40 = dma.hbm_to_vmem [thread:$0]  %s1, 256, %s35, [#allocation6], 64, 64, 4
    $region9: #{tpu_custom_call.1} parent=1 // pred_fallthru
      _
    // Predicated region
    $region10: #{tpu_custom_call.1} parent=1 // pred_check
      _
    $region11: #{tpu_custom_call.1} parent=1 // pred_check_branch
      %42 = sbr.rel (0) target = $region13
    $region12: #{tpu_custom_call.1} parent=1 // pred_region
      %s44 = ssub.s32 16, 16
      %45 = vsyncadd [#allocation6], %s44
      %s47 = sshll.u32 [#allocation7], 4
      %s48 = int_to_ptr.vmem [resolvable:$true] %s47
      %50 = dma.hbm_to_vmem [thread:$0]  %s2, 16, %s48, [#allocation6]
    $region13: #{tpu_custom_call.1} parent=1 // pred_fallthru
      _
    // Predicated region
    $region14: #{tpu_custom_call.1} parent=1 // pred_check
      _
    $region15: #{tpu_custom_call.1} parent=1 // pred_check_branch
      %52 = sbr.rel (0) target = $region17
    $region16: #{tpu_custom_call.1} parent=1 // pred_region
      %s54 = ssub.s32 512, 512
      %55 = vsyncadd [#allocation9], %s54
      %s56 = sshll.u32 [#allocation8], 4
      %s57 = int_to_ptr.vmem [resolvable:$true] %s56
      %62 = dma.hbm_to_vmem [thread:$0]  %s3, 512, %s57, [#allocation9], 64, 64, 4
    $region17: #{tpu_custom_call.1} parent=1 // pred_fallthru
      _
    // Predicated region
    $region18: #{tpu_custom_call.1} parent=1 // pred_check
      _
    $region19: #{tpu_custom_call.1} parent=1 // pred_check_branch
      %64 = sbr.rel (0) target = $region21
    $region20: #{tpu_custom_call.1} parent=1 // pred_region
      %s66 = ssub.s32 16, 16
      %67 = vsyncadd [#allocation9], %s66
      %s69 = sshll.u32 [#allocation10], 4
      %s70 = int_to_ptr.vmem [resolvable:$true] %s69
      %72 = dma.hbm_to_vmem [thread:$0]  %s4, 16, %s70, [#allocation9]
    $region21: #{tpu_custom_call.1} parent=1 // pred_fallthru
      _
    // Predicated region
    $region22: #{tpu_custom_call.1} parent=1 // pred_check
      _
    $region23: #{tpu_custom_call.1} parent=1 // pred_check_branch
      %74 = sbr.rel (0) target = $region25
    $region24: #{tpu_custom_call.1} parent=1 // pred_region
      %s76 = ssub.s32 16, 16
      %77 = vsyncadd [#allocation12], %s76
      %s79 = sshll.u32 [#allocation11], 4
      %s80 = int_to_ptr.vmem [resolvable:$true] %s79
      %82 = dma.hbm_to_vmem [thread:$0]  %s5, 16, %s80, [#allocation12]
    $region25: #{tpu_custom_call.1} parent=1 // pred_fallthru
      _
    // Predicated region
    $region26: #{tpu_custom_call.1} parent=1 // pred_check
      _
    $region27: #{tpu_custom_call.1} parent=1 // pred_check_branch
      %84 = sbr.rel (0) target = $region29
    $region28: #{tpu_custom_call.1} parent=1 // pred_region
      %s86 = ssub.s32 16, 16
      %87 = vsyncadd [#allocation12], %s86
      %s89 = sshll.u32 [#allocation13], 4
      %s90 = int_to_ptr.vmem [resolvable:$true] %s89
      %92 = dma.hbm_to_vmem [thread:$0]  %s6, 16, %s90, [#allocation12]
    $region29: #{tpu_custom_call.1} parent=1 // pred_fallthru
      _
    // Predicated region
    $region30: #{tpu_custom_call.1} parent=1 // pred_check
      _
    $region31: #{tpu_custom_call.1} parent=1 // pred_check_branch
      %94 = sbr.rel (0) target = $region33
    $region32: #{tpu_custom_call.1} parent=1 // pred_region
      %95 = dma.done [#allocation3], 256
    $region33: #{tpu_custom_call.1} parent=1 // pred_fallthru
      _
    // Predicated region
    $region34: #{tpu_custom_call.1} parent=1 // pred_check
      _
    $region35: #{tpu_custom_call.1} parent=1 // pred_check_branch
      %97 = sbr.rel (0) target = $region37
    $region36: #{tpu_custom_call.1} parent=1 // pred_region
      %98 = dma.done [#allocation6], 256
    $region37: #{tpu_custom_call.1} parent=1 // pred_fallthru
      _
    // Predicated region
    $region38: #{tpu_custom_call.1} parent=1 // pred_check
      _
    $region39: #{tpu_custom_call.1} parent=1 // pred_check_branch
      %100 = sbr.rel (0) target = $region41
    $region40: #{tpu_custom_call.1} parent=1 // pred_region
      %101 = dma.done [#allocation6], 16
    $region41: #{tpu_custom_call.1} parent=1 // pred_fallthru
      _
    // Predicated region
    $region42: #{tpu_custom_call.1} parent=1 // pred_check
      _
    $region43: #{tpu_custom_call.1} parent=1 // pred_check_branch
      %103 = sbr.rel (0) target = $region45
    $region44: #{tpu_custom_call.1} parent=1 // pred_region
      %104 = dma.done [#allocation9], 512
    $region45: #{tpu_custom_call.1} parent=1 // pred_fallthru
      _
    // Predicated region
    $region46: #{tpu_custom_call.1} parent=1 // pred_check
      _
    $region47: #{tpu_custom_call.1} parent=1 // pred_check_branch
      %106 = sbr.rel (0) target = $region49
    $region48: #{tpu_custom_call.1} parent=1 // pred_region
      %107 = dma.done [#allocation9], 16
    $region49: #{tpu_custom_call.1} parent=1 // pred_fallthru
      _
    // Predicated region
    $region50: #{tpu_custom_call.1} parent=1 // pred_check
      _
    $region51: #{tpu_custom_call.1} parent=1 // pred_check_branch
      %109 = sbr.rel (0) target = $region53
    $region52: #{tpu_custom_call.1} parent=1 // pred_region
      %110 = dma.done [#allocation12], 16
    $region53: #{tpu_custom_call.1} parent=1 // pred_fallthru
      _
    // Predicated region
    $region54: #{tpu_custom_call.1} parent=1 // pred_check
      _
    $region55: #{tpu_custom_call.1} parent=1 // pred_check_branch
      %112 = sbr.rel (0) target = $region57
    $region56: #{tpu_custom_call.1} parent=1 // pred_region
      %113 = dma.done [#allocation12], 16
    $region57: #{tpu_custom_call.1} parent=1 // pred_fallthru
      _
    %v115 = vld [vmem:[#allocation2] sm:$0xff]
    %v116 = vld [vmem:[#allocation2 + $0x8] sm:$0xff]
    %v117 = vpack.c.bf16 %v116, %v115
    %v118 = vld [vmem:[#allocation5] sm:$0xf]
    %v119 = vld [vmem:[#allocation5 + $0x4] sm:$0xf]
    %v120 = vld [vmem:[#allocation5 + $0x8] sm:$0xf]
    %v121 = vld [vmem:[#allocation5 + $0xc] sm:$0xf]
    %v122 = vld [vmem:[#allocation7] sm:$0x1]
    %v124 = vlaneseq
    %v125 = vshrl.u32 %v124, 7
    %v126 = vsub.s32 0, %v125
    %v127 = vrot.slane %v122, %v126
    %v133 = vunpack.c.l.b16 %v118
    %v134 = vunpack.c.l.b16 %v119
    %v135 = vunpack.c.l.b16 %v120
    %v136 = vunpack.c.l.b16 %v121
    %v137 = vpack.c.b16 %v134, %v133
    %v138 = vpack.c.b16 %v136, %v135
    %vm141 = vcmask 261120
    %v143 = vsel %vm141, %v117, 0
    %145 = vmatprep.subr.bf16.mxu0 0
    %146 = vmatpush1.bf16.msra.mxu0 %v137
    %147 = vmatprep.subr.bf16.mxu0 0
    %148 = vmatpush1.bf16.msra.mxu0 %v138
    %149 = vmatprep.subr.bf16.mxu0 0
    %150 = vmatpush1.bf16.msra.mxu0 0
    %151 = vmatprep.subr.bf16.mxu0 0
    %152 = vmatpush1.bf16.msra.mxu0 0
    %153 = vmatprep.subr.bf16.mxu0 0
    %154 = vmatpush1.bf16.msra.mxu0 0
    %155 = vmatprep.subr.bf16.mxu0 0
    %156 = vmatpush1.bf16.msra.mxu0 0
    %157 = vmatprep.subr.bf16.mxu0 0
    %158 = vmatpush1.bf16.msra.mxu0 0
    %159 = vmatprep.subr.bf16.mxu0 0
    %160 = vmatpush1.bf16.msra.mxu0 0
    %161 = vmatprep.subr.bf16.mxu0 0
    %162 = vmatpush1.bf16.msra.mxu0 0
    %163 = vmatprep.subr.bf16.mxu0 0
    %164 = vmatpush1.bf16.msra.mxu0 0
    %165 = vmatprep.subr.bf16.mxu0 0
    %166 = vmatpush1.bf16.msra.mxu0 0
    %167 = vmatprep.subr.bf16.mxu0 0
    %168 = vmatpush1.bf16.msra.mxu0 0
    %169 = vmatprep.subr.bf16.mxu0 0
    %170 = vmatpush1.bf16.msra.mxu0 0
    %171 = vmatprep.subr.bf16.mxu0 0
    %172 = vmatpush1.bf16.msra.mxu0 0
    %173 = vmatprep.subr.bf16.mxu0 0
    %174 = vmatpush1.bf16.msra.mxu0 0
    %175 = vmatprep.subr.bf16.mxu0 0
    %176 = vmatpush1.bf16.msra.mxu0 0
    %177 = vmatprep.mubr.bf16.mxu0 0
    %178 = vmatmul.mubr.bf16.gmra.mrb[0].mxu0 %v143
    %v179 = vpop.f32.mrb[0].mxu0
    %v180 = vadd.f32 %v127, %v179
    %v181 = vpop.f32.mrb[0].mxu0
    %v182 = vpop.f32.mrb[0].mxu0
    %v183 = vadd.f32 %v127, %v182
    %v184 = vpop.f32.mrb[0].mxu0
    %185 = vdwg.mxu0
    %v186 = vmax.f32 %v180, 0.0
    %v187 = vmax.f32 %v183, 0.0
    %v188 = vpack.c.bf16 %v187, %v186
    %v189 = vld [vmem:[#allocation8] sm:$0xf]
    %v190 = vld [vmem:[#allocation8 + $0x4] sm:$0xf]
    %v191 = vld [vmem:[#allocation8 + $0x8] sm:$0xf]
    %v192 = vld [vmem:[#allocation8 + $0xc] sm:$0xf]
    %v193 = vld [vmem:[#allocation8 + $0x10] sm:$0xf]
    %v194 = vld [vmem:[#allocation8 + $0x14] sm:$0xf]
    %v195 = vld [vmem:[#allocation8 + $0x18] sm:$0xf]
    %v196 = vld [vmem:[#allocation8 + $0x1c] sm:$0xf]
    %v197 = vld [vmem:[#allocation10] sm:$0x1]
    %v199 = vlaneseq
    %v200 = vshrl.u32 %v199, 7
    %v201 = vsub.s32 0, %v200
    %v202 = vrot.slane %v197, %v201
    %v212 = vunpack.c.l.b16 %v189
    %v213 = vunpack.c.l.b16 %v190
    %v214 = vunpack.c.l.b16 %v191
    %v215 = vunpack.c.l.b16 %v192
    %v216 = vunpack.c.l.b16 %v193
    %v217 = vunpack.c.l.b16 %v194
    %v218 = vunpack.c.l.b16 %v195
    %v219 = vunpack.c.l.b16 %v196
    %v220 = vpack.c.b16 %v213, %v212
    %v221 = vpack.c.b16 %v215, %v214
    %v222 = vpack.c.b16 %v217, %v216
    %v223 = vpack.c.b16 %v219, %v218
    %vm228 = vcmask 523264
    %v230 = vsel %vm228, %v188, 0
    %232 = vmatprep.subr.bf16.mxu0 0
    %233 = vmatpush1.bf16.msra.mxu0 %v220
    %234 = vmatprep.subr.bf16.mxu0 0
    %235 = vmatpush1.bf16.msra.mxu0 %v221
    %236 = vmatprep.subr.bf16.mxu0 0
    %237 = vmatpush1.bf16.msra.mxu0 %v222
    %238 = vmatprep.subr.bf16.mxu0 0
    %239 = vmatpush1.bf16.msra.mxu0 %v223
    %240 = vmatprep.subr.bf16.mxu0 0
    %241 = vmatpush1.bf16.msra.mxu0 0
    %242 = vmatprep.subr.bf16.mxu0 0
    %243 = vmatpush1.bf16.msra.mxu0 0
    %244 = vmatprep.subr.bf16.mxu0 0
    %245 = vmatpush1.bf16.msra.mxu0 0
    %246 = vmatprep.subr.bf16.mxu0 0
    %247 = vmatpush1.bf16.msra.mxu0 0
    %248 = vmatprep.subr.bf16.mxu0 0
    %249 = vmatpush1.bf16.msra.mxu0 0
    %250 = vmatprep.subr.bf16.mxu0 0
    %251 = vmatpush1.bf16.msra.mxu0 0
    %252 = vmatprep.subr.bf16.mxu0 0
    %253 = vmatpush1.bf16.msra.mxu0 0
    %254 = vmatprep.subr.bf16.mxu0 0
    %255 = vmatpush1.bf16.msra.mxu0 0
    %256 = vmatprep.subr.bf16.mxu0 0
    %257 = vmatpush1.bf16.msra.mxu0 0
    %258 = vmatprep.subr.bf16.mxu0 0
    %259 = vmatpush1.bf16.msra.mxu0 0
    %260 = vmatprep.subr.bf16.mxu0 0
    %261 = vmatpush1.bf16.msra.mxu0 0
    %262 = vmatprep.subr.bf16.mxu0 0
    %263 = vmatpush1.bf16.msra.mxu0 0
    %264 = vmatprep.mubr.bf16.mxu0 0
    %265 = vmatmul.mubr.bf16.gmra.mrb[0].mxu0 %v230
    %v266 = vpop.f32.mrb[0].mxu0
    %v267 = vadd.f32 %v202, %v266
    %v268 = vpop.f32.mrb[0].mxu0
    %v269 = vpop.f32.mrb[0].mxu0
    %v270 = vadd.f32 %v202, %v269
    %v271 = vpop.f32.mrb[0].mxu0
    %272 = vdwg.mxu0
    %v273 = vadd.f32 %v267, %v115
    %v274 = vadd.f32 %v270, %v116
    %v275 = vsel %vm141, %v273, 0.0
    %276 = vadd.xlane.f32.xlu0 %v275
    %v277 = vpop.xlane.xlu0 %276
    %v278 = vsel %vm141, %v274, 0.0
    %279 = vadd.xlane.f32.xlu0 %v278
    %v280 = vpop.xlane.xlu0 %279
    %v281 = vrcp.pop 32.0
    %v282 = vmul.f32 %v277, %v281
    %v283 = vmul.f32 %v280, %v281
    %v284 = vsub.f32 %v273, %v282
    %v285 = vsub.f32 %v274, %v283
    %v286 = vmul.f32 %v284, %v284
    %v287 = vmul.f32 %v285, %v285
    %v288 = vsel %vm141, %v286, 0.0
    %289 = vadd.xlane.f32.xlu0 %v288
    %v290 = vpop.xlane.xlu0 %289
    %v291 = vsel %vm141, %v287, 0.0
    %292 = vadd.xlane.f32.xlu0 %v291
    %v293 = vpop.xlane.xlu0 %292
    %v294 = vmul.f32 %v290, %v281
    %v295 = vmul.f32 %v293, %v281
    %v296 = vadd.f32 %v294, 1e-05
    %v297 = vadd.f32 %v295, 1e-05
    %v298 = vrsqrt.pop %v296
    %v299 = vrsqrt.pop %v297
    %v300 = vmul.f32 %v284, %v298
    %v301 = vmul.f32 %v285, %v299
    %v302 = vld [vmem:[#allocation11] sm:$0x1]
    %v304 = vlaneseq
    %v305 = vshrl.u32 %v304, 7
    %v306 = vsub.s32 0, %v305
    %v307 = vrot.slane %v302, %v306
    %v309 = vmul.f32 %v300, %v307
    %v310 = vmul.f32 %v301, %v307
    %v311 = vld [vmem:[#allocation13] sm:$0x1]
    %v313 = vlaneseq
    %v314 = vshrl.u32 %v313, 7
    %v315 = vsub.s32 0, %v314
    %v316 = vrot.slane %v311, %v315
    %v318 = vadd.f32 %v309, %v316
    %v319 = vadd.f32 %v310, %v316
    %320 = vst.msk [vmem:[#allocation14] sm:$0xff] %vm141, %v318
    %321 = vst.msk [vmem:[#allocation14 + $0x8] sm:$0xff] %vm141, %v319
    // Predicated region
    $region58: #{tpu_custom_call.1} parent=1 // pred_check
      _
    $region59: #{tpu_custom_call.1} parent=1 // pred_check_branch
      %323 = sbr.rel (0) target = $region61
    $region60: #{tpu_custom_call.1} parent=1 // pred_region
      %s325 = ssub.s32 256, 256
      %326 = vsyncadd [#allocation4], %s325
      %s327 = sshll.u32 [#allocation14], 4
      %s328 = int_to_ptr.vmem [resolvable:$true] %s327
      %333 = dma.vmem_to_hbm [thread:$0]  %s328, 256, %s7, [#allocation4], 128, 128, 8
    $region61: #{tpu_custom_call.1} parent=1 // pred_fallthru
      _
    // Predicated region
    $region62: #{tpu_custom_call.1} parent=1 // pred_check
      _
    $region63: #{tpu_custom_call.1} parent=1 // pred_check_branch
      %335 = sbr.rel (0) target = $region65
    $region64: #{tpu_custom_call.1} parent=1 // pred_region
      %336 = dma.done [#allocation4], 256
    $region65: #{tpu_custom_call.1} parent=1 // pred_fallthru
      _
    %337 = vsyncpa [#allocation3], 1
    %338 = vsyncpa [#allocation6], 1
    %339 = vsyncpa [#allocation9], 1
    %340 = vsyncpa [#allocation12], 1
    %341 = vsyncpa [#allocation4], 1

</llo_original>
